<compile_context>
chip_gen: v5e
topology: v5e:2x2
jax: 0.10.0
libtpu: 0.0.40
codegen_flags: <defaults>
</compile_context>

<pallas_src>
import functools
import numpy as np

import jax
import jax.numpy as jnp
from jax.experimental import pallas as pl
from jax.experimental.pallas import tpu as pltpu


# ----------------------------------------------------------------------------------
# generic pallas helpers: full-array blocks, grid=(1,)
# ----------------------------------------------------------------------------------
_IDX_MAPS = {
    1: lambda i: (0,),
    2: lambda i: (0, 0),
    3: lambda i: (0, 0, 0),
    4: lambda i: (0, 0, 0, 0),
}


def _spec(shape):
    return pl.BlockSpec(shape, _IDX_MAPS[len(shape)])


def _pcall(kernel, out_sds, *inputs):
    return pl.pallas_call(
        kernel,
        grid=(1,),
        out_shape=out_sds,
        in_specs=[_spec(a.shape) for a in inputs],
        out_specs=_spec(out_sds.shape),
        compiler_params=pltpu.CompilerParams(dimension_semantics=("arbitrary",)),
    )(*inputs)


# ----------------------------------------------------------------------------------
# in-kernel math helpers (operate on jnp values inside kernels)
# ----------------------------------------------------------------------------------
def _gelu_tanh(x):
    c = 0.7978845608028654  # sqrt(2/pi)
    return 0.5 * x * (1.0 + jnp.tanh(c * (x + 0.044715 * x * x * x)))


def _layernorm(x, g, b, eps):
    mu = jnp.mean(x, axis=-1, keepdims=True)
    xc = x - mu
    var = jnp.mean(xc * xc, axis=-1, keepdims=True)
    return xc * jax.lax.rsqrt(var + eps) * g + b


# ----------------------------------------------------------------------------------
# Pallas kernels
# ----------------------------------------------------------------------------------
def _lin_kernel(x_ref, w_ref, b_ref, o_ref, *, act):
    y = jnp.dot(x_ref[...], w_ref[...], preferred_element_type=jnp.float32) + b_ref[...]
    if act == "gelu":
        y = _gelu_tanh(y)
    o_ref[...] = y


def _lin_res_kernel(x_ref, w_ref, res_ref, o_ref):
    o_ref[...] = (jnp.dot(x_ref[...], w_ref[...], preferred_element_type=jnp.float32)
                  + res_ref[...])


def _lin_res_ln_kernel(x_ref, w_ref, b_ref, res_ref, g_ref, be_ref, o_ref, *, eps):
    y = jnp.dot(x_ref[...], w_ref[...], preferred_element_type=jnp.float32) + b_ref[...]
    o_ref[...] = _layernorm(res_ref[...] + y, g_ref[...], be_ref[...], eps)


def _ffn_tail_kernel(x_ref, w1_ref, b1_ref, w2_ref, b2_ref,
                     g2_ref, be2_ref, gs_ref, bes_ref, o_ref, *, eps):
    # conv1 -> GELU -> conv2 -> +residual -> LN2 (Attention_Block)
    # -> LN (ScaleGraphBlock.norm) -> GELU (ScaleGraphBlock.gelu), all VMEM-resident.
    x = x_ref[...]
    h = _gelu_tanh(jnp.dot(x, w1_ref[...], preferred_element_type=jnp.float32) + b1_ref[...])
    y = jnp.dot(h, w2_ref[...], preferred_element_type=jnp.float32) + b2_ref[...]
    z = _layernorm(x + y, g2_ref[...], be2_ref[...], eps)
    z = _layernorm(z, gs_ref[...], bes_ref[...], eps)
    o_ref[...] = _gelu_tanh(z)


def _attn_kernel(q_ref, k_ref, v_ref, o_ref, *, scale):
    q = q_ref[...]          # (BH, L, E)
    k = k_ref[...]
    v = v_ref[...]
    s = jax.lax.dot_general(q, k, (((2,), (2,)), ((0,), (0,))),
                            preferred_element_type=jnp.float32) * scale
    m = jnp.max(s, axis=-1, keepdims=True)
    p = jnp.exp(s - m)
    denom = jnp.sum(p, axis=-1, keepdims=True)
    p = p * pl.reciprocal(denom, approx=True)
    o_ref[...] = jax.lax.dot_general(p, v, (((2,), (1,)), ((0,), (0,))),
                                     preferred_element_type=jnp.float32)


def _kan_kernel(x_ref, basis_ref, wb_ref, ws_ref, o_ref):
    x = x_ref[...]
    xs = x * jax.lax.logistic(x)  # SiLU
    base = jnp.dot(xs, wb_ref[...], preferred_element_type=jnp.float32)
    spl = jnp.dot(basis_ref[...], ws_ref[...], preferred_element_type=jnp.float32)
    o_ref[...] = base + spl


def _mixprop_kernel(sc_ref, at_ref, o_ref, *, gd, alpha):
    # h stays VMEM-resident across all gd propagation hops.
    sc = sc_ref[...]          # (R, c_out)
    a_t = at_ref[...]         # (c_out, c_out)  == a.T (row-normalized adjacency)
    h = sc
    o_ref[0] = h
    for j in range(gd):
        hn = jnp.dot(h, a_t, preferred_element_type=jnp.float32)
        h = alpha * sc + (1.0 - alpha) * hn
        o_ref[j + 1] = h


# ----------------------------------------------------------------------------------
# kernel wrappers (unpadded, full-block)
# ----------------------------------------------------------------------------------
def pallas_linear(x, w, b, act=None):
    return _pcall(functools.partial(_lin_kernel, act=act),
                  jax.ShapeDtypeStruct((x.shape[0], w.shape[1]), jnp.float32), x, w, b)


def pallas_linear_res(x, w, res):
    return _pcall(_lin_res_kernel,
                  jax.ShapeDtypeStruct((x.shape[0], w.shape[1]), jnp.float32), x, w, res)


def pallas_linear_res_ln(x, w, b, res, g, beta, eps=1e-5):
    return _pcall(functools.partial(_lin_res_ln_kernel, eps=eps),
                  jax.ShapeDtypeStruct((x.shape[0], w.shape[1]), jnp.float32),
                  x, w, b, res, g, beta)


def pallas_ffn_tail(x, w1, b1, w2, b2, g2, be2, gs, bes, eps=1e-5):
    return _pcall(functools.partial(_ffn_tail_kernel, eps=eps),
                  jax.ShapeDtypeStruct(x.shape, jnp.float32),
                  x, w1, b1, w2, b2, g2, be2, gs, bes)


def pallas_attention(q, k, v):
    BH, L, E = q.shape
    if L == 1:                       # softmax over a single key is exactly the identity
        return v
    return _pcall(functools.partial(_attn_kernel, scale=1.0 / float(np.sqrt(E))),
                  jax.ShapeDtypeStruct((BH, L, E), jnp.float32), q, k, v)


def pallas_kan_matmuls(x, basis, wb_t, ws_t):
    return _pcall(_kan_kernel,
                  jax.ShapeDtypeStruct((x.shape[0], wb_t.shape[1]), jnp.float32),
                  x, basis, wb_t, ws_t)


def pallas_mixprop(sc, a_t, gd, alpha):
    R, c = sc.shape
    return _pcall(functools.partial(_mixprop_kernel, gd=gd, alpha=float(alpha)),
                  jax.ShapeDtypeStruct((gd + 1, R, c), jnp.float32), sc, a_t)


# ----------------------------------------------------------------------------------
# KANLinear (efficient-KAN forward); spline weights pre-scaled/transposed at init
# ----------------------------------------------------------------------------------
def kan_bsplines(x, grid, spline_order):
    # x: (rows, in) ; grid: (in, grid_size + 2*spline_order + 1).  Elementwise, XLA-fused.
    x = x[..., None]
    bases = jnp.logical_and(x >= grid[:, :-1], x < grid[:, 1:]).astype(jnp.float32)
    for k in range(1, spline_order + 1):
        left = (x - grid[:, : -(k + 1)]) / (grid[:, k:-1] - grid[:, : -(k + 1)]) * bases[..., :-1]
        right = (grid[:, (k + 1):] - x) / (grid[:, (k + 1):] - grid[:, 1:-k]) * bases[..., 1:]
        bases = left + right
    return bases  # (rows, in, grid_size + spline_order)


def kan_apply(p, x, spline_order):
    rows, _ = x.shape
    basis = kan_bsplines(x, p["grid"], spline_order).reshape(rows, -1)
    return pallas_kan_matmuls(x, basis, p["base_w_t"], p["spline_w_t"])


# ----------------------------------------------------------------------------------
# DataEmbedding: circular Conv1d(k=3) + TimeFeature linear + sin/cos PE, one kernel
# ----------------------------------------------------------------------------------
def data_embedding(p, x, x_mark):
    B, T, C = x.shape
    D = p["pos_pe"].shape[1]
    xp = jnp.concatenate([x[:, -1:, :], x, x[:, :1, :]], axis=1)                 # circular pad
    patches = jnp.stack([xp[:, kh:kh + T, :] for kh in range(3)], axis=-1)       # (B,T,C,3)
    rows = jnp.concatenate([patches.reshape(B * T, C * 3),
                            x_mark.reshape(B * T, -1)], axis=1)                  # fused token+time
    pos = jnp.broadcast_to(p["pos_pe"][:T][None], (B, T, D)).reshape(B * T, D)
    out = pallas_linear_res(rows, p["embed_w"], pos)                             # one matmul+add
    return out.reshape(B, T, D)                                                  # dropout = id (eval)


# ----------------------------------------------------------------------------------
# Attention_Block + ScaleGraphBlock norm/gelu (4 fused kernels)
# ----------------------------------------------------------------------------------
def attention_plus(ap, sgb_g, sgb_b, x, n_heads):
    Bb, L, D = x.shape
    E = D // n_heads
    R = Bb * L
    x2 = x.reshape(R, D)
    qkv = pallas_linear(x2, ap["wqkv"], ap["bqkv"])                              # fused QKV
    qkv = qkv.reshape(Bb, L, 3, n_heads, E).transpose(2, 0, 3, 1, 4)
    qkv = qkv.reshape(3, Bb * n_heads, L, E)
    attn = pallas_attention(qkv[0], qkv[1], qkv[2])                              # all heads, one block
    attn = attn.reshape(Bb, n_heads, L, E).transpose(0, 2, 1, 3).reshape(R, D)
    x2 = pallas_linear_res_ln(attn, ap["wo"], ap["bo"], x2, ap["n1_g"], ap["n1_b"])
    return pallas_ffn_tail(x2, ap["w1"], ap["b1"], ap["w2"], ap["b2"],
                           ap["n2_g"], ap["n2_b"], sgb_g, sgb_b)                 # (R, D)


# ----------------------------------------------------------------------------------
# GraphBlock (MSGNet)
# ----------------------------------------------------------------------------------
def graph_block(p, x, cfg):
    B, T, D = x.shape
    c_out, CC, SK = cfg["c_out"], cfg["conv_channel"], cfg["skip_channel"]
    gd, alpha = cfg["gcn_depth"], cfg["propalpha"]

    # adaptive adjacency (tiny -> plain XLA inside the jitted layer)
    adp = jax.nn.softmax(jax.nn.relu(p["nodevec1"] @ p["nodevec2"]), axis=1)
    adj = adp + jnp.eye(c_out, dtype=jnp.float32)
    a = adj / jnp.sum(adj, axis=1, keepdims=True)

    # start_conv: im2col over the feature axis -> MXU matmul
    xt = jnp.transpose(x, (0, 2, 1))                                             # (B, D, T)
    K = D - c_out + 1
    patches = jnp.stack([xt[:, i:i + K, :] for i in range(c_out)], axis=1)       # (B,c_out,K,T)
    rows = patches.transpose(0, 1, 3, 2).reshape(B * c_out * T, K)
    sc_rows = pallas_linear(rows, p["start_w_t"], p["start_b"])                  # (B*c_out*T, CC)

    # mixprop: single kernel keeps h resident across all gd hops
    sc_nodes = sc_rows.reshape(B, c_out, T, CC).transpose(0, 3, 2, 1).reshape(B * CC * T, c_out)
    ho = pallas_mixprop(sc_nodes, a.T, gd, alpha)                                # (gd+1, B*CC*T, c_out)

    # mlp over concatenated hops + GELU (fused epilogue)
    hp = (ho.reshape(gd + 1, B, CC, T, c_out)
            .transpose(1, 4, 3, 0, 2)
            .reshape(B * c_out * T, (gd + 1) * CC))
    hm = pallas_linear(hp, p["mlp_w_t"], p["mlp_b"], act="gelu")                 # (B*c_out*T, SK)

    # end_conv (kernel spans the full time axis)
    hg = hm.reshape(B, c_out, T, SK).transpose(0, 1, 3, 2).reshape(B * c_out, SK * T)
    eo = pallas_linear(hg, p["end_w_t"], p["end_b"])                             # (B*c_out, T)

    # linear + residual + LayerNorm (fused epilogue)
    eo_rows = eo.reshape(B, c_out, T).transpose(0, 2, 1).reshape(B * T, c_out)
    out = pallas_linear_res_ln(eo_rows, p["lin_w_t"], p["lin_b"],
                               x.reshape(B * T, D), p["norm_g"], p["norm_b"])
    return out.reshape(B, T, D)


# ----------------------------------------------------------------------------------
# ScaleGraphBlock / Model (jitted stages; only the top-k indices cross to host)
# ----------------------------------------------------------------------------------
def build_layer_fn(cfg):
    seq_len = cfg["seq_len"]
    n_heads = cfg["n_heads"]
    spline_order = cfg["spline_order"]

    def branch(lp, i, x, scale):
        B, T, N = x.shape
        xg = graph_block(lp["gconv"][i], x, cfg)
        if seq_len % scale != 0:
            length = (seq_len // scale + 1) * scale
            pad = jnp.zeros((B, length - seq_len, N), jnp.float32)
            xg = jnp.concatenate([xg, pad], axis=1)
        else:
            length = seq_len
        y = xg.reshape(B * (length // scale), scale, N)
        y2 = attention_plus(lp["att0"], lp["norm_g"], lp["norm_b"], y, n_heads)  # (rows, N)
        y2 = kan_apply(lp["kan"], y2, spline_order)
        return y2.reshape(B, length, N)[:, :seq_len, :]

    @functools.partial(jax.jit, static_argnames=("scales",))
    def layer_fn(lp, x, scale_weight, scales):
        res = [branch(lp, i, x, s) for i, s in enumerate(scales)]
        res = jnp.stack(res, axis=-1)                                            # (B, T, N, k)
        sw = jax.nn.softmax(scale_weight, axis=1)[:, None, None, :]
        return jnp.sum(res * sw, axis=-1) + x

    return layer_fn


def build_model(cfg):
    seq_len = cfg["seq_len"]
    top_k = cfg["top_k"]

    @jax.jit
    def embed_fn(p_embed, x_enc, x_mark_enc):
        means = jnp.mean(x_enc, axis=1, keepdims=True)
        # torch.var defaults to unbiased=True -> ddof=1 (matches the reference)
        std = jnp.sqrt(jnp.var(x_enc, axis=1, keepdims=True, ddof=1) + 1e-5)
        xn = (x_enc - means) / std
        return data_embedding(p_embed, xn, x_mark_enc), means, std

    @jax.jit
    def fft_fn(x):
        xf = jnp.fft.rfft(x, axis=1)
        amp = jnp.abs(xf)                                                        # (B, F, N)
        freq = amp.mean(axis=0).mean(axis=-1)
        freq = freq.at[0].set(0.0)
        _, top_idx = jax.lax.top_k(freq, top_k)
        scale_weight = jnp.take(amp.mean(axis=-1), top_idx, axis=1)              # (B, k)
        return top_idx, scale_weight

    layer_fn = build_layer_fn(cfg)

    @jax.jit
    def head_fn(p_proj, p_s2p, enc_out, means, std):
        B, T, D = enc_out.shape
        c_out, pred_len, so = cfg["c_out"], cfg["pred_len"], cfg["spline_order"]
        proj = kan_apply(p_proj, enc_out.reshape(B * T, D), so).reshape(B, T, c_out)
        dec = kan_apply(p_s2p, proj.reshape(B, T * c_out), so)
        dec = dec.reshape(B, pred_len, c_out)
        return dec * std + means

    def forward(params, x_enc, x_mark_enc, x_dec, x_mark_dec):
        enc, means, std = embed_fn(params["embed"], x_enc, x_mark_enc)
        for lp in params["layers"]:
            top_idx, scale_weight = fft_fn(enc)
            idx = np.asarray(jax.device_get(top_idx))           # only k ints cross to host
            # period = seq_len // idx  (guard idx==0, which the reference mishandles)
            scales = tuple(int(seq_len // int(i)) if int(i) > 0 else int(seq_len) for i in idx)
            enc = layer_fn(lp, enc, scale_weight, scales=scales)
        return head_fn(params["projection"], params["seq2pred"], enc, means, std)

    return forward


# ----------------------------------------------------------------------------------
# deterministic parameter init (kernel-ready layouts: pre-transposed, (1,N) biases)
# ----------------------------------------------------------------------------------
class _KeyGen:
    def __init__(self, key):
        self._key = key

    def __call__(self):
        self._key, sub = jax.random.split(self._key)
        return sub


def init_params(key, cfg):
    kg = _KeyGen(key)
    D, C, mark, T = cfg["d_model"], cfg["enc_in"], cfg["mark_dim"], cfg["seq_len"]

    def nrm(shape, s):
        return (jax.random.normal(kg(), shape) * s).astype(jnp.float32)

    def zeros(*shape):
        return jnp.zeros(shape, jnp.float32)

    def ones(*shape):
        return jnp.ones(shape, jnp.float32)

    def kan_params(in_f, out_f):
        G, S = cfg["grid_size"], cfg["spline_order"]
        h = 2.0 / G
        g1d = jnp.arange(-S, G + S + 1, dtype=jnp.float32) * h - 1.0
        grid = jnp.broadcast_to(g1d, (in_f, g1d.shape[0]))
        spline_w = nrm((out_f, in_f, G + S), 0.1)
        spline_scaler = ones(out_f, in_f)
        # pre-scale + pre-transpose (kernel-ready): (in*(G+S), out)
        spline_w_t = (spline_w * spline_scaler[..., None]).reshape(out_f, -1).T
        return dict(base_w_t=nrm((in_f, out_f), 1.0 / np.sqrt(in_f)),
                    spline_w_t=spline_w_t,
                    grid=grid)

    def attn_params():
        dff = cfg["d_ff"]
        return dict(
            wqkv=nrm((D, 3 * D), 1.0 / np.sqrt(D)), bqkv=zeros(1, 3 * D),
            wo=nrm((D, D), 1.0 / np.sqrt(D)), bo=zeros(1, D),
            w1=nrm((D, dff), 1.0 / np.sqrt(D)), b1=zeros(1, dff),
            w2=nrm((dff, D), 1.0 / np.sqrt(dff)), b2=zeros(1, D),
            n1_g=ones(1, D), n1_b=zeros(1, D),
            n2_g=ones(1, D), n2_b=zeros(1, D))

    def graph_params():
        c_out, CC, SK = cfg["c_out"], cfg["conv_channel"], cfg["skip_channel"]
        gd, nd = cfg["gcn_depth"], cfg["node_dim"]
        K = D - c_out + 1
        return dict(nodevec1=nrm((c_out, nd), 1.0), nodevec2=nrm((nd, c_out), 1.0),
                    start_w_t=nrm((K, CC), 0.1), start_b=zeros(1, CC),
                    mlp_w_t=nrm(((gd + 1) * CC, SK), 0.1), mlp_b=zeros(1, SK),
                    end_w_t=nrm((SK * T, T), 0.05), end_b=zeros(1, T),
                    lin_w_t=nrm((c_out, D), 0.2), lin_b=zeros(1, D),
                    norm_g=ones(1, D), norm_b=zeros(1, D))

    def sgb_params():
        return dict(att0=attn_params(), norm_g=ones(1, D), norm_b=zeros(1, D),
                    gconv=[graph_params() for _ in range(cfg["top_k"])],
                    kan=kan_params(D, D))

    # sinusoidal positional embedding (deterministic)
    pos = jnp.arange(T, dtype=jnp.float32)[:, None]
    div = jnp.exp(jnp.arange(0, D, 2, dtype=jnp.float32) * (-(np.log(10000.0) / D)))
    pe = jnp.zeros((T, D), jnp.float32)
    pe = pe.at[:, 0::2].set(jnp.sin(pos * div))
    pe = pe.at[:, 1::2].set(jnp.cos(pos * div))

    return dict(
        embed=dict(embed_w=nrm((C * 3 + mark, D), 0.3), pos_pe=pe),   # [token conv | time linear]
        layers=[sgb_params() for _ in range(cfg["e_layers"])],
        projection=kan_params(D, cfg["c_out"]),
        seq2pred=kan_params(T * cfg["c_out"], cfg["pred_len"] * cfg["c_out"]),
    )


# ----------------------------------------------------------------------------------
if __name__ == "__main__":
    cfg = dict(seq_len=16, pred_len=8, enc_in=4, c_out=4, d_model=16, d_ff=32,
               n_heads=2, e_layers=1, top_k=2, conv_channel=8, skip_channel=8,
               gcn_depth=2, propalpha=0.05, node_dim=8, mark_dim=4,
               grid_size=5, spline_order=3)

    master = jax.random.PRNGKey(0)
    k_params, k_data = jax.random.split(master)
    params = init_params(k_params, cfg)

    B = 2
    k1, k2, k3, k4 = jax.random.split(k_data, 4)
    x_enc = jax.random.normal(k1, (B, cfg["seq_len"], cfg["enc_in"]), dtype=jnp.float32)
    x_mark_enc = jax.random.normal(k2, (B, cfg["seq_len"], cfg["mark_dim"]), dtype=jnp.float32)
    x_dec = jax.random.normal(k3, (B, cfg["pred_len"], cfg["enc_in"]), dtype=jnp.float32)
    x_mark_dec = jax.random.normal(k4, (B, cfg["pred_len"], cfg["mark_dim"]), dtype=jnp.float32)

    forward = build_model(cfg)
    out = forward(params, x_enc, x_mark_enc, x_dec, x_mark_dec)
    out = jax.block_until_ready(out)
    assert out.shape == (B, cfg["pred_len"], cfg["c_out"]), out.shape
    assert bool(jnp.all(jnp.isfinite(out)))
    print("KERNEL_OK")
</pallas_src>

<mosaic_0001>
module attributes {stable_mosaic.version = 11 : i64} {
  func.func @_lin_res_kernel(%arg0: i32, %arg1: memref<32x16xf32, #tpu.memory_space<vmem>>, %arg2: memref<16x16xf32, #tpu.memory_space<vmem>>, %arg3: memref<32x16xf32, #tpu.memory_space<vmem>>, %arg4: memref<32x16xf32, #tpu.memory_space<vmem>>) attributes {dimension_semantics = [#tpu.dimension_semantics<arbitrary>], iteration_bounds = array<i64: 1>, scalar_prefetch = 0 : i64, scratch_operands = 0 : i64, tpu.core_type = #tpu.core_type<tc>, window_params = [{pipeline_mode = #tpu.pipeline_mode<synchronous>, transform_indices = @transform_0, window_bounds = array<i64: 32, 16>}, {pipeline_mode = #tpu.pipeline_mode<synchronous>, transform_indices = @transform_1, window_bounds = array<i64: 16, 16>}, {pipeline_mode = #tpu.pipeline_mode<synchronous>, transform_indices = @transform_2, window_bounds = array<i64: 32, 16>}, {pipeline_mode = #tpu.pipeline_mode<synchronous>, transform_indices = @transform_3, window_bounds = array<i64: 32, 16>}]} {
    %c0 = arith.constant 0 : index
    %c0_0 = arith.constant 0 : index
    %0 = vector.load %arg1[%c0, %c0_0] : memref<32x16xf32, #tpu.memory_space<vmem>>, vector<32x16xf32>
    %c0_1 = arith.constant 0 : index
    %c0_2 = arith.constant 0 : index
    %1 = vector.load %arg2[%c0_1, %c0_2] : memref<16x16xf32, #tpu.memory_space<vmem>>, vector<16x16xf32>
    %cst = arith.constant dense<0.000000e+00> : vector<32x16xf32>
    %2 = tpu.matmul %0, %1, %cst {dimension_numbers = #tpu.dot_dimension_numbers<[1], [0], [0], [1], [0, 0, 1, 1], [], []>} : vector<32x16xf32>, vector<16x16xf32>, vector<32x16xf32> -> vector<32x16xf32>
    %c0_3 = arith.constant 0 : index
    %c0_4 = arith.constant 0 : index
    %3 = vector.load %arg3[%c0_3, %c0_4] : memref<32x16xf32, #tpu.memory_space<vmem>>, vector<32x16xf32>
    %4 = arith.addf %2, %3 : vector<32x16xf32>
    %c0_5 = arith.constant 0 : index
    %c0_6 = arith.constant 0 : index
    %5 = vector.load %arg4[%c0_5, %c0_6] : memref<32x16xf32, #tpu.memory_space<vmem>>, vector<32x16xf32>
    tpu.vector_store %arg4[%c0_5, %c0_6], %4 {strides = array<i32>} : memref<32x16xf32, #tpu.memory_space<vmem>>, vector<32x16xf32>,
    return
  }
  func.func @transform_0(%arg0: i32) -> (i32, i32) {
    %c0_i32 = arith.constant 0 : i32
    %c0_i32_0 = arith.constant 0 : i32
    %c0_i32_1 = arith.constant 0 : i32
    return %c0_i32, %c0_i32_0 : i32, i32
  }
  func.func @transform_1(%arg0: i32) -> (i32, i32) {
    %c0_i32 = arith.constant 0 : i32
    %c0_i32_0 = arith.constant 0 : i32
    %c0_i32_1 = arith.constant 0 : i32
    return %c0_i32, %c0_i32_0 : i32, i32
  }
  func.func @transform_2(%arg0: i32) -> (i32, i32) {
    %c0_i32 = arith.constant 0 : i32
    %c0_i32_0 = arith.constant 0 : i32
    %c0_i32_1 = arith.constant 0 : i32
    return %c0_i32, %c0_i32_0 : i32, i32
  }
  func.func @transform_3(%arg0: i32) -> (i32, i32) {
    %c0_i32 = arith.constant 0 : i32
    %c0_i32_0 = arith.constant 0 : i32
    %c0_i32_1 = arith.constant 0 : i32
    return %c0_i32, %c0_i32_0 : i32, i32
  }
}

</mosaic_0001>

<llo_original>
// kernel: embed_fn.1
$region0: #{embed_fn.1}
  #allocation0 [shape = 'u32[]', space=smem, size = 0x4, offset = 0x4, fixed_abs, tag = 'smem constant byte address 0x4 - core index']
  #allocation1 [shape = 'u32[72,128]{1,0:T(1,128)}', space=vmem, size = 0x9000, scoped, tag = 'internal scratch']
  %s0 = inlined_call_operand.vmem [shape: f32[32,16], index: 0, kind: input, shape index: {}]
  %s1 = inlined_call_operand.vmem [shape: f32[16,16], index: 1, kind: input, shape index: {}]
  %s2 = inlined_call_operand.vmem [shape: f32[32,16], index: 2, kind: input, shape index: {}]
  %s3 = inlined_call_operand.hbm [shape: f32[32,16], index: 3, kind: output, shape index: {}]
  %s4 = sld [smem:[#allocation0]]
  $region22: #{embed_fn.1} parent=0
    _
  %s6 = ssub.s32 1, %s4
  %s7 = scalar_select 0, %s6, %s4
  $region1: #{embed_fn.1} parent=0
    #allocation2 [shape = 'u8[16384]{0}', space=vmem, size = 0x4000, scoped, tag = 'output window, operand 0, single buffered']
    #allocation3 [shape = 's32[1]{0}', space=sflag, size = 0x4, scoped, tag = 'scoped memory for embed_fn.1']
    %8 = vsyncpa [#allocation3], 0
    // Predicated region
    $region2: #{embed_fn.1} parent=1 // pred_check
      _
    $region3: #{embed_fn.1} parent=1 // pred_check_branch
      %10 = sbr.rel (0) target = $region5
    $region4: #{embed_fn.1} parent=1 // pred_region
      _
    $region5: #{embed_fn.1} parent=1 // pred_fallthru
      _
    // Predicated region
    $region6: #{embed_fn.1} parent=1 // pred_check
      _
    $region7: #{embed_fn.1} parent=1 // pred_check_branch
      %12 = sbr.rel (0) target = $region9
    $region8: #{embed_fn.1} parent=1 // pred_region
      _
    $region9: #{embed_fn.1} parent=1 // pred_fallthru
      _
    // Predicated region
    $region10: #{embed_fn.1} parent=1 // pred_check
      _
    $region11: #{embed_fn.1} parent=1 // pred_check_branch
      %14 = sbr.rel (0) target = $region13
    $region12: #{embed_fn.1} parent=1 // pred_region
      _
    $region13: #{embed_fn.1} parent=1 // pred_fallthru
      _
    %v15 = vld [vmem:[%s0] sm:$0xff]
    %v16 = vld [vmem:[%s0 + $0x8] sm:$0xff]
    %v17 = vld [vmem:[%s0 + $0x10] sm:$0xff]
    %v18 = vld [vmem:[%s0 + $0x18] sm:$0xff]
    %v19 = vld [vmem:[%s1] sm:$0xff]
    %v20 = vld [vmem:[%s1 + $0x8] sm:$0xff]
    %v21 = vld [vmem:[%s2] sm:$0xff]
    %v22 = vld [vmem:[%s2 + $0x8] sm:$0xff]
    %v23 = vld [vmem:[%s2 + $0x10] sm:$0xff]
    %v24 = vld [vmem:[%s2 + $0x18] sm:$0xff]
    %vm25 = vcmask 130048
    %v27 = vsel %vm25, %v15, 0
    %v30 = vsel %vm25, %v16, 0
    %v33 = vsel %vm25, %v17, 0
    %v36 = vsel %vm25, %v18, 0
    %38 = vmatpush.msra.mxu0 0.0
    %39 = vmatpush.msra.mxu0 0.0
    %40 = vmatpush.msra.mxu0 0.0
    %41 = vmatpush.msra.mxu0 0.0
    %42 = vmatpush.msra.mxu0 0.0
    %43 = vmatpush.msra.mxu0 0.0
    %44 = vmatpush.msra.mxu0 0.0
    %45 = vmatpush.msra.mxu0 0.0
    %46 = vmatpush.msra.mxu0 0.0
    %47 = vmatpush.msra.mxu0 0.0
    %48 = vmatpush.msra.mxu0 0.0
    %49 = vmatpush.msra.mxu0 0.0
    %50 = vmatpush.msra.mxu0 0.0
    %51 = vmatpush.msra.mxu0 0.0
    %52 = vmatpush.msra.mxu0 %v20
    %53 = vmatpush.msra.mxu0 %v19
    %54 = vmatmul.f32.gmra.mxu0 %v27
    %v55 = vpop.f32.mrf.mxu0
    %v56 = vadd.f32 %v21, %v55
    %57 = vmatmul.f32.gmra.mxu0 %v30
    %v58 = vpop.f32.mrf.mxu0
    %v59 = vadd.f32 %v22, %v58
    %60 = vmatmul.f32.gmra.mxu0 %v33
    %v61 = vpop.f32.mrf.mxu0
    %v62 = vadd.f32 %v23, %v61
    %63 = vmatmul.f32.gmra.mxu0 %v36
    %v64 = vpop.f32.mrf.mxu0
    %v65 = vadd.f32 %v24, %v64
    %66 = vdwg.mxu0
    %67 = vst.msk [vmem:[#allocation2] sm:$0xff] %vm25, %v56
    %68 = vst.msk [vmem:[#allocation2 + $0x8] sm:$0xff] %vm25, %v59
    %69 = vst.msk [vmem:[#allocation2 + $0x10] sm:$0xff] %vm25, %v62
    %70 = vst.msk [vmem:[#allocation2 + $0x18] sm:$0xff] %vm25, %v65
    // Predicated region
    $region14: #{embed_fn.1} parent=1 // pred_check
      _
    $region15: #{embed_fn.1} parent=1 // pred_check_branch
      %72 = sbr.rel (0) target = $region17
    $region16: #{embed_fn.1} parent=1 // pred_region
      %74 = vsyncadd [#allocation3], 0
      %s75 = sshll.u32 [#allocation2], 4
      %s76 = int_to_ptr.vmem [resolvable:$true] %s75
      %s77 = sshll.u32 %s3, 4
      %s78 = int_to_ptr.hbm [resolvable:$true] %s77
      %83 = dma.vmem_to_hbm [thread:$0]  %s76, 512, %s78, [#allocation3], 128, 128, 8
    $region17: #{embed_fn.1} parent=1 // pred_fallthru
      _
    // Predicated region
    $region18: #{embed_fn.1} parent=1 // pred_check
      _
    $region19: #{embed_fn.1} parent=1 // pred_check_branch
      %85 = sbr.rel (0) target = $region21
    $region20: #{embed_fn.1} parent=1 // pred_region
      %87 = dma.done [#allocation3], 512
    $region21: #{embed_fn.1} parent=1 // pred_fallthru
      _
    %88 = vsyncpa [#allocation3], 1

</llo_original>
